<compile_context>
chip_gen: v7x
topology: tpu7x:2x2x1
jax: 0.10.0
libtpu: 0.0.40
codegen_flags: <defaults>
</compile_context>

<pallas_src>
import jax
import jax.numpy as jnp
from jax.experimental import pallas as pl
from jax.experimental.pallas import tpu as pltpu

_LANE = 128
_SUBLANE = 8
# ~2 MiB f32 tile -> with double-buffered in + out that's ~8 MiB of VMEM,
# inside v5e's 16 MiB default scoped limit and safe for v7x's 64 MiB physical.
_TARGET_TILE_ELEMS = (2 * 1024 * 1024) // 4


def _softplus_kernel(x_ref, o_ref):
    x = x_ref[...]
    # y = log(1 + exp(x)) written in the numerically stable form
    # max(x, 0) + log1p(exp(-|x|)): avoids inf for large x and precision loss
    # for small |x|; identical values otherwise.
    o_ref[...] = jnp.maximum(x, 0.0) + jnp.log1p(jnp.exp(-jnp.abs(x)))


def _choose_cols(total):
    # Prefer a wide, lane-dense (multiple-of-128) last dim that divides the
    # flat element count (no padding needed); fall back to 128 + padding.
    for cols in (4096, 2048, 1024, 512, 256, 128):
        if total % cols == 0:
            return cols
    return _LANE


def mish_forward(x):
    """Elementwise y = log(1 + exp(x)); any shape, f32/bf16."""
    orig_shape = x.shape
    flat = x.reshape(-1)
    total = flat.shape[0]

    cols = _choose_cols(total)
    rows = -(-total // cols)  # ceil division

    # Row tile: multiple of 8 sublanes, targeting ~_TARGET_TILE_ELEMS per tile.
    block_rows = max(_SUBLANE, (_TARGET_TILE_ELEMS // cols) // _SUBLANE * _SUBLANE)
    block_rows = min(block_rows, rows)  # tiny inputs: full-extent block is legal

    padded_rows = -(-rows // block_rows) * block_rows
    padded_total = padded_rows * cols
    if padded_total != total:
        flat = jnp.pad(flat, (0, padded_total - total))
    x2d = flat.reshape(padded_rows, cols)

    num_blocks = padded_rows // block_rows
    bytes_per_elem = x.dtype.itemsize

    out2d = pl.pallas_call(
        _softplus_kernel,
        out_shape=jax.ShapeDtypeStruct((padded_rows, cols), x.dtype),
        grid_spec=pl.GridSpec(
            grid=(num_blocks,),
            in_specs=[pl.BlockSpec((block_rows, cols), lambda i: (i, 0))],
            out_specs=pl.BlockSpec((block_rows, cols), lambda i: (i, 0)),
        ),
        compiler_params=pltpu.CompilerParams(
            dimension_semantics=("parallel",),
            vmem_limit_bytes=32 * 1024 * 1024,
        ),
        cost_estimate=pl.CostEstimate(
            flops=4 * padded_total,
            transcendentals=2 * padded_total,
            bytes_accessed=2 * padded_total * bytes_per_elem,
        ),
    )(x2d)

    return out2d.reshape(-1)[:total].reshape(orig_shape)


if __name__ == "__main__":
    key = jax.random.PRNGKey(0)
    x = jax.random.normal(key, (2, 4, 16, 16), dtype=jnp.float32)

    y = mish_forward(x)
    jax.block_until_ready(y)

    # correctness check against plain-JAX reference (same math as the module)
    y_ref = jnp.log1p(jnp.exp(x))
    assert y.shape == x.shape and y.dtype == x.dtype
    assert jnp.allclose(y, y_ref, atol=1e-6, rtol=1e-6)

    print("KERNEL_OK")
</pallas_src>

<mosaic_0001>
module attributes {stable_mosaic.version = 11 : i64} {
  func.func @_softplus_kernel(%arg0: i32, %arg1: memref<1x2048xf32, #tpu.memory_space<vmem>>, %arg2: memref<1x2048xf32, #tpu.memory_space<vmem>>) attributes {dimension_semantics = [#tpu.dimension_semantics<parallel>], iteration_bounds = array<i64: 1>, scalar_prefetch = 0 : i64, scratch_operands = 0 : i64, tpu.core_type = #tpu.core_type<tc>, window_params = [{transform_indices = @transform_0, window_bounds = array<i64: 1, 2048>}, {transform_indices = @transform_1, window_bounds = array<i64: 1, 2048>}]} {
    %c0 = arith.constant 0 : index
    %c0_0 = arith.constant 0 : index
    %0 = vector.load %arg1[%c0, %c0_0] : memref<1x2048xf32, #tpu.memory_space<vmem>>, vector<1x2048xf32>
    %cst = arith.constant 0.000000e+00 : f32
    %1 = vector.broadcast %cst : f32 to vector<1x2048xf32>
    %2 = arith.maximumf %0, %1 : vector<1x2048xf32>
    %3 = math.absf %0 : vector<1x2048xf32>
    %cst_1 = arith.constant 0.000000e+00 : f32
    %4 = vector.broadcast %cst_1 : f32 to vector<1x2048xf32>
    %5 = arith.subf %4, %3 : vector<1x2048xf32>
    %6 = math.exp %5 : vector<1x2048xf32>
    %7 = math.log1p %6 : vector<1x2048xf32>
    %8 = arith.addf %2, %7 : vector<1x2048xf32>
    %c0_2 = arith.constant 0 : index
    %c0_3 = arith.constant 0 : index
    %9 = vector.load %arg2[%c0_2, %c0_3] : memref<1x2048xf32, #tpu.memory_space<vmem>>, vector<1x2048xf32>
    tpu.vector_store %arg2[%c0_2, %c0_3], %8 {strides = array<i32>} : memref<1x2048xf32, #tpu.memory_space<vmem>>, vector<1x2048xf32>,
    return
  }
  func.func @transform_0(%arg0: i32) -> (i32, i32) {
    %c0_i32 = arith.constant 0 : i32
    %c0_i32_0 = arith.constant 0 : i32
    return %arg0, %c0_i32 : i32, i32
  }
  func.func @transform_1(%arg0: i32) -> (i32, i32) {
    %c0_i32 = arith.constant 0 : i32
    %c0_i32_0 = arith.constant 0 : i32
    return %arg0, %c0_i32 : i32, i32
  }
}

</mosaic_0001>

<llo_original>
// kernel: tpu_custom_call.1
$region0: #{tpu_custom_call.1}
  #allocation0 [shape = 'u32[]', space=smem, size = 0x4, offset = 0x4, fixed_abs, tag = 'smem constant byte address 0x4 - core index']
  #allocation1 [shape = 'u32[144,128]{1,0:T(1,128)}', space=vmem, size = 0x12000, scoped, tag = 'internal scratch']
  %s0 = inlined_call_operand.hbm [shape: f32[1,2048], index: 0, kind: input, shape index: {}]
  %s1 = inlined_call_operand.hbm [shape: f32[1,2048], index: 1, kind: output, shape index: {}]
  %s2 = sld [smem:[#allocation0]]
  $region18: #{tpu_custom_call.1} parent=0
    _
  %s4 = ssub.s32 1, %s2
  %s5 = scalar_select 0, %s4, %s2
  $region1: #{tpu_custom_call.1} parent=0
    #allocation2 [shape = 'u8[8192]{0}', space=vmem, size = 0x2000, scoped, tag = 'input window, operand 0, single buffered']
    #allocation3 [shape = 's32[1]{0}', space=sflag, size = 0x4, scoped, tag = 'scoped memory for tpu_custom_call.1']
    #allocation4 [shape = 's32[1]{0}', space=sflag, size = 0x4, scoped, tag = 'scoped memory for tpu_custom_call.1']
    #allocation5 [shape = 'u8[8192]{0}', space=vmem, size = 0x2000, scoped, tag = 'output window, operand 0, single buffered']
    %6 = vsyncpa [#allocation3], 0
    %7 = vsyncpa [#allocation4], 0
    // Predicated region
    $region2: #{tpu_custom_call.1} parent=1 // pred_check
      _
    $region3: #{tpu_custom_call.1} parent=1 // pred_check_branch
      %9 = sbr.rel (0) target = $region5
    $region4: #{tpu_custom_call.1} parent=1 // pred_region
      %s11 = ssub.s32 256, 256
      %12 = vsyncadd [#allocation3], %s11
      %s14 = sshll.u32 [#allocation2], 4
      %s15 = int_to_ptr.vmem [resolvable:$true] %s14
      %17 = dma.hbm_to_vmem [thread:$0]  %s0, 256, %s15, [#allocation3]
    $region5: #{tpu_custom_call.1} parent=1 // pred_fallthru
      _
    // Predicated region
    $region6: #{tpu_custom_call.1} parent=1 // pred_check
      _
    $region7: #{tpu_custom_call.1} parent=1 // pred_check_branch
      %19 = sbr.rel (0) target = $region9
    $region8: #{tpu_custom_call.1} parent=1 // pred_region
      %20 = dma.done [#allocation3], 256
    $region9: #{tpu_custom_call.1} parent=1 // pred_fallthru
      _
    %v21 = vld [vmem:[#allocation2] sm:$0xff]
    %v22 = vld [vmem:[#allocation2 + $0x8] sm:$0xff]
    %v23 = vmax.f32 %v21, 0.0
    %v24 = vmax.f32 %v22, 0.0
    %v25 = vand.u32 2147483647, %v21
    %v26 = vand.u32 2147483647, %v22
    %v27 = vsub.f32 0.0, %v25
    %v28 = vsub.f32 0.0, %v26
    %v29 = vmul.f32 %v27, 1.442695
    %v30 = vpow.pop %v29
    %v31 = vmul.f32 %v28, 1.442695
    %v32 = vpow.pop %v31
    %v33 = vadd.f32 %v30, 1.0
    %v34 = vlog2.pop %v33
    %v35 = vmul.f32 %v34, 0.6931472
    %v36 = vmul.f32 -0.5, %v30
    %v37 = vadd.f32 %v36, 1.0
    %v38 = vmul.f32 %v37, %v30
    %v39 = vand.u32 2147483647, %v30
    %vm40 = vcmp.lt.f32.partialorder %v39, 0.0004427343
    %v41 = vsel %vm40, %v38, %v35
    %v42 = vadd.f32 %v32, 1.0
    %v43 = vlog2.pop %v42
    %v44 = vmul.f32 %v43, 0.6931472
    %v45 = vmul.f32 -0.5, %v32
    %v46 = vadd.f32 %v45, 1.0
    %v47 = vmul.f32 %v46, %v32
    %v48 = vand.u32 2147483647, %v32
    %vm49 = vcmp.lt.f32.partialorder %v48, 0.0004427343
    %v50 = vsel %vm49, %v47, %v44
    %v51 = vadd.f32 %v23, %v41
    %v52 = vadd.f32 %v24, %v50
    %53 = vst [vmem:[#allocation5] sm:$0xff] %v51
    %54 = vst [vmem:[#allocation5 + $0x8] sm:$0xff] %v52
    // Predicated region
    $region10: #{tpu_custom_call.1} parent=1 // pred_check
      _
    $region11: #{tpu_custom_call.1} parent=1 // pred_check_branch
      %56 = sbr.rel (0) target = $region13
    $region12: #{tpu_custom_call.1} parent=1 // pred_region
      %s58 = ssub.s32 256, 256
      %59 = vsyncadd [#allocation4], %s58
      %s61 = sshll.u32 [#allocation5], 4
      %s62 = int_to_ptr.vmem [resolvable:$true] %s61
      %64 = dma.vmem_to_hbm [thread:$0]  %s62, 256, %s1, [#allocation4]
    $region13: #{tpu_custom_call.1} parent=1 // pred_fallthru
      _
    // Predicated region
    $region14: #{tpu_custom_call.1} parent=1 // pred_check
      _
    $region15: #{tpu_custom_call.1} parent=1 // pred_check_branch
      %66 = sbr.rel (0) target = $region17
    $region16: #{tpu_custom_call.1} parent=1 // pred_region
      %67 = dma.done [#allocation4], 256
    $region17: #{tpu_custom_call.1} parent=1 // pred_fallthru
      _
    %68 = vsyncpa [#allocation3], 1
    %69 = vsyncpa [#allocation4], 1

</llo_original>
